<compile_context>
chip_gen: v5e
topology: v5e:2x2
jax: 0.10.0
libtpu: 0.0.40
codegen_flags: <defaults>
</compile_context>

<pallas_src>
import functools
import math

import jax
import jax.numpy as jnp
from jax import lax
from jax.experimental import pallas as pl
from jax.experimental.pallas import tpu as pltpu

_LANE = 128
_ACC_ROWS = 8                      # fixed accumulator height: one (8,128) f32 vreg
_VMEM_LIMIT = 48 * 1024 * 1024     # < 64 MiB per-TC (v7x); trivial on v5e/v6e


def _round_up(x, m):
    return ((x + m - 1) // m) * m


def _jnp_loss(std, pred_score, z):
    """Fused single-pass fallback (also used as the numerical reference)."""
    err = (jnp.asarray(std, jnp.float32) * pred_score.astype(jnp.float32)
           + z.astype(jnp.float32))
    sq = jnp.square(jnp.abs(err))
    b = sq.shape[0]
    return jnp.mean(0.5 * jnp.sum(sq.reshape(b, -1), axis=-1))


def _device_num_splits():
    """2 row-tile streams on 2-TensorCore chips (v7x), 1 elsewhere."""
    try:
        kind = jax.devices()[0].device_kind.lower()
    except Exception:
        return 1
    return 2 if ("v7" in kind or "7x" in kind) else 1


def _dsm_kernel(std_ref, pred_ref, z_ref, out_ref, acc_ref, *,
                inv_scale, total_rows, rows_per_tile, tiles_per_core):
    """Grid: (core_split, batch, row_tile).

    std_ref : [B]          SMEM, per-sample std
    pred_ref: [1, tr, 128] VMEM tile of the lane-dense pred_score view
    z_ref   : [1, tr, 128] VMEM tile of the lane-dense z view
    out_ref : [1, 1]       SMEM per-core partial loss
    acc_ref : [8, 128]     small fixed f32 vector accumulator (per core)
    """
    c = pl.program_id(0)
    b = pl.program_id(1)
    t = pl.program_id(2)
    nb = pl.num_programs(1)
    nt = pl.num_programs(2)

    @pl.when(jnp.logical_and(b == 0, t == 0))
    def _init():
        acc_ref[...] = jnp.zeros_like(acc_ref)

    # Global row-tile index for this core's tile; rows of it that are real data.
    gt = c * tiles_per_core + t
    valid = total_rows - gt * rows_per_tile     # > rows_per_tile, partial, or <= 0

    s = std_ref[b]                              # scalar f32 from SMEM
    p = pred_ref[0].astype(jnp.float32)         # [tr, 128]
    n = z_ref[0].astype(jnp.float32)            # [tr, 128]
    # TODO(synk): on v7x with bf16 inputs the scale-add could stay in bf16 to
    # shave VALU ops; kept in f32 here for exact parity with the reference.
    err = s * p + n
    sq = err * err

    def _accumulate(x):
        # Major-axis reduce into the one-vreg accumulator: same VALU adds as a
        # big accumulator, but no (tr,128) VMEM load+store per tile.
        acc_ref[...] += jnp.sum(x.reshape(-1, _ACC_ROWS, _LANE), axis=0)

    @pl.when(valid >= rows_per_tile)            # interior tile: no masking cost
    def _full_tile():
        _accumulate(sq)

    @pl.when(valid < rows_per_tile)             # boundary (or empty) tile
    def _boundary_tile():
        row = lax.broadcasted_iota(jnp.int32, (rows_per_tile, _LANE), 0)
        _accumulate(jnp.where(row < valid, sq, jnp.float32(0.0)))

    @pl.when(jnp.logical_and(b == nb - 1, t == nt - 1))
    def _finish():
        # Single cross-lane XLU reduce over 8*128 elements + SMEM store per core.
        out_ref[0, 0] = jnp.sum(acc_ref[...]) * jnp.float32(inv_scale)


def denoising_score_matching_loss(std, pred_score, z, *, use_kernel=None,
                                  target_rows=8192, num_splits=None):
    """std: scalar or per-sample (e.g. [B,1,1,1]); pred_score/z: [B, ...]."""
    assert pred_score.shape == z.shape, "pred_score and z must have equal shapes"
    B = pred_score.shape[0]
    D = math.prod(pred_score.shape[1:])

    # Per-sample std vector (scalar / [B] / [B,1,...,1]); anything else -> jnp path.
    std_arr = jnp.asarray(std, jnp.float32)
    if std_arr.size == 1:
        std_vec = jnp.broadcast_to(std_arr.reshape(()), (B,))
    elif std_arr.size == B and std_arr.ndim >= 1 and std_arr.shape[0] == B:
        std_vec = std_arr.reshape(B)
    else:
        std_vec = None

    # Sublane multiple for the streamed dtype (8 for f32, 16 for bf16, 32 for i8).
    min_item = min(jnp.dtype(pred_score.dtype).itemsize, jnp.dtype(z.dtype).itemsize)
    sub = _ACC_ROWS * max(1, 4 // max(1, min_item))

    R = D // _LANE
    kernel_ok = (std_vec is not None) and (D > 0) and (D % _LANE == 0) and (R >= sub)
    if use_kernel is None:                       # auto: kernel only when it pays off
        use_kernel = kernel_ok and (B * D >= (1 << 20))
    if use_kernel and not kernel_ok:
        # Misaligned feature count / per-element std / tiny input: a fused jnp
        # reduction reads each input exactly once, which beats pad + kernel.
        use_kernel = False
    if not use_kernel:
        return _jnp_loss(std, pred_score, z)

    if num_splits is None:
        num_splits = _device_num_splits()

    # Row-tile planning: tr is a multiple of `sub`, never larger than R (so no
    # block ever exceeds the array), and large enough to amortize per-step cost.
    target_rows = _round_up(max(int(target_rows), sub), sub)
    tr = min(target_rows, (R // sub) * sub)
    n_cover = pl.cdiv(R, tr)                     # tiles needed to cover R rows
    num_splits = max(1, min(num_splits, n_cover))
    n_blocks = _round_up(n_cover, num_splits)    # total tiles (incl. clamped empties)
    n_t = n_blocks // num_splits                 # tiles per core per sample

    # Lane-dense [B, R, 128] views: contiguous reshapes, no HBM copy, no pad.
    pred3 = pred_score.reshape(B, R, _LANE)
    z3 = z.reshape(B, R, _LANE)

    inv_scale = 0.5 / B                          # 0.5 * sum_features, mean over batch

    def _in_map(c, b, t):
        # Clamp so tiles introduced by rounding n_blocks up to num_splits re-read
        # the last valid block (in-bounds DMA); the kernel masks them to zero.
        return (b, jnp.minimum(c * n_t + t, n_cover - 1), 0)

    partials = pl.pallas_call(
        functools.partial(_dsm_kernel, inv_scale=inv_scale, total_rows=R,
                          rows_per_tile=tr, tiles_per_core=n_t),
        out_shape=jax.ShapeDtypeStruct((num_splits, 1), jnp.float32),
        grid_spec=pltpu.PrefetchScalarGridSpec(
            num_scalar_prefetch=0,
            grid=(num_splits, B, n_t),
            in_specs=[
                # Per-sample std lives entirely in SMEM (no VMEM buffer pair).
                pl.BlockSpec(memory_space=pltpu.MemorySpace.SMEM),
                pl.BlockSpec((1, tr, _LANE), _in_map),
                pl.BlockSpec((1, tr, _LANE), _in_map),
            ],
            out_specs=pl.BlockSpec((1, 1), lambda c, b, t: (c, 0),
                                   memory_space=pltpu.MemorySpace.SMEM),
            scratch_shapes=[pltpu.VMEM((_ACC_ROWS, _LANE), jnp.float32)],
        ),
        compiler_params=pltpu.CompilerParams(
            # Leading axis: split row tiles across TensorCores (v7x megacore);
            # batch and row-tile axes are reduction axes for the accumulator.
            dimension_semantics=("parallel", "arbitrary", "arbitrary"),
            vmem_limit_bytes=_VMEM_LIMIT,
        ),
    )(std_vec, pred3, z3)

    return jnp.sum(partials)


if __name__ == "__main__":
    key = jax.random.PRNGKey(0)
    k1, k2, k3, k4, k5, k6, k7 = jax.random.split(key, 7)

    # Check 1: f32, NCHW, D = 1024 (divisible by 128), single full tile/sample.
    B, C, H, W = 2, 4, 16, 16
    pred = jax.random.normal(k1, (B, C, H, W), dtype=jnp.float32)
    zz = jax.random.normal(k2, (B, C, H, W), dtype=jnp.float32)
    std = jax.random.uniform(k3, (B, 1, 1, 1), dtype=jnp.float32,
                             minval=0.1, maxval=1.0)
    loss = jax.block_until_ready(
        denoising_score_matching_loss(std, pred, zz, use_kernel=True))
    ref = jax.block_until_ready(_jnp_loss(std, pred, zz))
    assert jnp.allclose(loss, ref, rtol=1e-5, atol=1e-5), (loss, ref)

    # Check 2: bf16 inputs, ragged row count (R = 21 -> boundary-masked tile).
    p2 = jax.random.normal(k4, (2, 3, 16, 56), dtype=jnp.bfloat16)
    z2 = jax.random.normal(k5, (2, 3, 16, 56), dtype=jnp.bfloat16)
    std2 = jax.random.uniform(k6, (2, 1, 1, 1), dtype=jnp.float32,
                              minval=0.1, maxval=1.0)
    loss2 = jax.block_until_ready(
        denoising_score_matching_loss(std2, p2, z2, use_kernel=True))
    ref2 = jax.block_until_ready(_jnp_loss(std2, p2, z2))
    assert jnp.allclose(loss2, ref2, rtol=1e-4, atol=1e-5), (loss2, ref2)

    # Check 3: scalar std, multi-tile per sample + boundary tile
    # (R = 250 rows, forced small tiles of 64 rows -> 4 tiles, last has 58 rows).
    p3 = jax.random.normal(k7, (2, 2, 125, 128), dtype=jnp.float32)
    n3 = jax.random.normal(k1, (2, 2, 125, 128), dtype=jnp.float32)
    std3 = jnp.float32(0.37)
    loss3 = jax.block_until_ready(
        denoising_score_matching_loss(std3, p3, n3, use_kernel=True, target_rows=64))
    ref3 = jax.block_until_ready(_jnp_loss(std3, p3, n3))
    assert jnp.allclose(loss3, ref3, rtol=1e-4, atol=1e-5), (loss3, ref3)

    print("KERNEL_OK")
</pallas_src>

<mosaic_0001>
module attributes {stable_mosaic.version = 11 : i64} {
  func.func @_dsm_kernel(%arg0: i32, %arg1: i32, %arg2: i32, %arg3: memref<2xf32, #tpu.memory_space<smem>>, %arg4: memref<1x8x128xf32, #tpu.memory_space<vmem>>, %arg5: memref<1x8x128xf32, #tpu.memory_space<vmem>>, %arg6: memref<1x1xf32, #tpu.memory_space<smem>>, %arg7: memref<8x128xf32, #tpu.memory_space<vmem>>) attributes {dimension_semantics = [#tpu.dimension_semantics<parallel>, #tpu.dimension_semantics<arbitrary>, #tpu.dimension_semantics<arbitrary>], iteration_bounds = array<i64: 1, 2, 1>, scalar_prefetch = 0 : i64, scratch_operands = 1 : i64, tpu.core_type = #tpu.core_type<tc>, window_params = [{transform_indices = @transform_0, window_bounds = array<i64: 2>}, {transform_indices = @transform_1, window_bounds = array<i64: 1, 8, 128>}, {transform_indices = @transform_2, window_bounds = array<i64: 1, 8, 128>}, {transform_indices = @transform_3, window_bounds = array<i64: 1, 1>}]} {
    %c0_i32 = arith.constant 0 : i32
    %0 = arith.cmpi eq, %arg1, %c0_i32 : i32
    %c0_i32_0 = arith.constant 0 : i32
    %1 = arith.cmpi eq, %arg2, %c0_i32_0 : i32
    %2 = arith.andi %0, %1 : i1
    %3 = arith.extui %2 : i1 to i32
    %c0_i32_1 = arith.constant 0 : i32
    %4 = arith.cmpi ne, %3, %c0_i32_1 : i32
    scf.if %4 {
      %cst = arith.constant 0.000000e+00 : f32
      %30 = vector.broadcast %cst : f32 to vector<8x128xf32>
      %c0_15 = arith.constant 0 : index
      %c0_16 = arith.constant 0 : index
      %31 = vector.load %arg7[%c0_15, %c0_16] : memref<8x128xf32, #tpu.memory_space<vmem>>, vector<8x128xf32>
      tpu.vector_store %arg7[%c0_15, %c0_16], %30 {strides = array<i32>} : memref<8x128xf32, #tpu.memory_space<vmem>>, vector<8x128xf32>,
    } else {
    }
    %c1_i32 = arith.constant 1 : i32
    %5 = arith.muli %arg0, %c1_i32 : i32
    %6 = arith.addi %5, %arg2 : i32
    %c8_i32 = arith.constant 8 : i32
    %7 = arith.muli %6, %c8_i32 : i32
    %c8_i32_2 = arith.constant 8 : i32
    %8 = arith.subi %c8_i32_2, %7 : i32
    %9 = arith.index_cast %arg1 : i32 to index
    %10 = memref.load %arg3[%9] : memref<2xf32, #tpu.memory_space<smem>>
    %c0 = arith.constant 0 : index
    %c0_3 = arith.constant 0 : index
    %c0_4 = arith.constant 0 : index
    %11 = vector.load %arg4[%c0, %c0_3, %c0_4] : memref<1x8x128xf32, #tpu.memory_space<vmem>>, vector<1x8x128xf32>
    %12 = vector.shape_cast %11 : vector<1x8x128xf32> to vector<8x128xf32>
    %c0_5 = arith.constant 0 : index
    %c0_6 = arith.constant 0 : index
    %c0_7 = arith.constant 0 : index
    %13 = vector.load %arg5[%c0_5, %c0_6, %c0_7] : memref<1x8x128xf32, #tpu.memory_space<vmem>>, vector<1x8x128xf32>
    %14 = vector.shape_cast %13 : vector<1x8x128xf32> to vector<8x128xf32>
    %15 = vector.broadcast %10 : f32 to vector<8x128xf32>
    %16 = arith.mulf %15, %12 : vector<8x128xf32>
    %17 = arith.addf %16, %14 : vector<8x128xf32>
    %18 = arith.mulf %17, %17 : vector<8x128xf32>
    %c8_i32_8 = arith.constant 8 : i32
    %19 = arith.cmpi sge, %8, %c8_i32_8 : i32
    %20 = arith.extui %19 : i1 to i32
    %c0_i32_9 = arith.constant 0 : i32
    %21 = arith.cmpi ne, %20, %c0_i32_9 : i32
    scf.if %21 {
      %c0_15 = arith.constant 0 : index
      %c0_16 = arith.constant 0 : index
      %30 = vector.load %arg7[%c0_15, %c0_16] : memref<8x128xf32, #tpu.memory_space<vmem>>, vector<8x128xf32>
      %31 = vector.shape_cast %18 : vector<8x128xf32> to vector<1x8x128xf32>
      %cst = arith.constant dense<0.000000e+00> : vector<8x128xf32>
      %32 = vector.multi_reduction <add>, %31, %cst [0] : vector<1x8x128xf32> to vector<8x128xf32>
      %33 = arith.addf %30, %32 : vector<8x128xf32>
      %c0_17 = arith.constant 0 : index
      %c0_18 = arith.constant 0 : index
      %34 = vector.load %arg7[%c0_17, %c0_18] : memref<8x128xf32, #tpu.memory_space<vmem>>, vector<8x128xf32>
      tpu.vector_store %arg7[%c0_17, %c0_18], %33 {strides = array<i32>} : memref<8x128xf32, #tpu.memory_space<vmem>>, vector<8x128xf32>,
    } else {
    }
    %c8_i32_10 = arith.constant 8 : i32
    %22 = arith.cmpi slt, %8, %c8_i32_10 : i32
    %23 = arith.extui %22 : i1 to i32
    %c0_i32_11 = arith.constant 0 : i32
    %24 = arith.cmpi ne, %23, %c0_i32_11 : i32
    scf.if %24 {
      %30 = tpu.iota {dimensions = array<i32: 0>} : vector<8x128xi32>
      %31 = vector.broadcast %8 : i32 to vector<8x128xi32>
      %32 = arith.cmpi slt, %30, %31 : vector<8x128xi32>
      %cst = arith.constant 0.000000e+00 : f32
      %33 = vector.broadcast %cst : f32 to vector<8x128xf32>
      %34 = arith.select %32, %18, %33 : vector<8x128xi1>, vector<8x128xf32>
      %c0_15 = arith.constant 0 : index
      %c0_16 = arith.constant 0 : index
      %35 = vector.load %arg7[%c0_15, %c0_16] : memref<8x128xf32, #tpu.memory_space<vmem>>, vector<8x128xf32>
      %36 = vector.shape_cast %34 : vector<8x128xf32> to vector<1x8x128xf32>
      %cst_17 = arith.constant dense<0.000000e+00> : vector<8x128xf32>
      %37 = vector.multi_reduction <add>, %36, %cst_17 [0] : vector<1x8x128xf32> to vector<8x128xf32>
      %38 = arith.addf %35, %37 : vector<8x128xf32>
      %c0_18 = arith.constant 0 : index
      %c0_19 = arith.constant 0 : index
      %39 = vector.load %arg7[%c0_18, %c0_19] : memref<8x128xf32, #tpu.memory_space<vmem>>, vector<8x128xf32>
      tpu.vector_store %arg7[%c0_18, %c0_19], %38 {strides = array<i32>} : memref<8x128xf32, #tpu.memory_space<vmem>>, vector<8x128xf32>,
    } else {
    }
    %c1_i32_12 = arith.constant 1 : i32
    %25 = arith.cmpi eq, %arg1, %c1_i32_12 : i32
    %c0_i32_13 = arith.constant 0 : i32
    %26 = arith.cmpi eq, %arg2, %c0_i32_13 : i32
    %27 = arith.andi %25, %26 : i1
    %28 = arith.extui %27 : i1 to i32
    %c0_i32_14 = arith.constant 0 : i32
    %29 = arith.cmpi ne, %28, %c0_i32_14 : i32
    scf.if %29 {
      %c0_15 = arith.constant 0 : index
      %c0_16 = arith.constant 0 : index
      %30 = vector.load %arg7[%c0_15, %c0_16] : memref<8x128xf32, #tpu.memory_space<vmem>>, vector<8x128xf32>
      %31 = vector.shape_cast %30 : vector<8x128xf32> to vector<1x8x128xf32>
      %cst = arith.constant dense<0.000000e+00> : vector<1xf32>
      %32 = vector.multi_reduction <add>, %31, %cst [1, 2] : vector<1x8x128xf32> to vector<1xf32>
      %33 = vector.shape_cast %32 : vector<1xf32> to vector<1x1x1xf32>
      %34 = vector.extract %33[0, 0, 0] : f32 from vector<1x1x1xf32>
      %cst_17 = arith.constant 2.500000e-01 : f32
      %35 = arith.mulf %34, %cst_17 : f32
      %c0_18 = arith.constant 0 : index
      %c0_19 = arith.constant 0 : index
      %36 = memref.load %arg6[%c0_18, %c0_19] : memref<1x1xf32, #tpu.memory_space<smem>>
      memref.store %35, %arg6[%c0_18, %c0_19] : memref<1x1xf32, #tpu.memory_space<smem>>
    } else {
    }
    return
  }
  func.func @transform_0(%arg0: i32, %arg1: i32, %arg2: i32) -> i32 {
    %c0_i32 = arith.constant 0 : i32
    %c0_i32_0 = arith.constant 0 : i32
    return %c0_i32 : i32
  }
  func.func @transform_1(%arg0: i32, %arg1: i32, %arg2: i32) -> (i32, i32, i32) {
    %c1_i32 = arith.constant 1 : i32
    %0 = arith.muli %arg0, %c1_i32 : i32
    %1 = arith.addi %0, %arg2 : i32
    %c0_i32 = arith.constant 0 : i32
    %2 = arith.minsi %1, %c0_i32 : i32
    %c0_i32_0 = arith.constant 0 : i32
    %c0_i32_1 = arith.constant 0 : i32
    return %arg1, %2, %c0_i32_0 : i32, i32, i32
  }
  func.func @transform_2(%arg0: i32, %arg1: i32, %arg2: i32) -> (i32, i32, i32) {
    %c1_i32 = arith.constant 1 : i32
    %0 = arith.muli %arg0, %c1_i32 : i32
    %1 = arith.addi %0, %arg2 : i32
    %c0_i32 = arith.constant 0 : i32
    %2 = arith.minsi %1, %c0_i32 : i32
    %c0_i32_0 = arith.constant 0 : i32
    %c0_i32_1 = arith.constant 0 : i32
    return %arg1, %2, %c0_i32_0 : i32, i32, i32
  }
  func.func @transform_3(%arg0: i32, %arg1: i32, %arg2: i32) -> (i32, i32) {
    %c0_i32 = arith.constant 0 : i32
    %c0_i32_0 = arith.constant 0 : i32
    return %arg0, %c0_i32 : i32, i32
  }
}

</mosaic_0001>

<llo_original>
// kernel: tpu_custom_call.1
$region0: #{tpu_custom_call.1}
  #allocation0 [shape = 'u32[]', space=smem, size = 0x4, offset = 0x4, fixed_abs, tag = 'smem constant byte address 0x4 - core index']
  #allocation1 [shape = 'u32[72,128]{1,0:T(1,128)}', space=vmem, size = 0x9000, scoped, tag = 'internal scratch']
  #allocation2 [shape = 'f32[8,128]{1,0:T(8,128)}', space=vmem, size = 0x1000, scoped, tag = 'scratch operand']
  %s0 = inlined_call_operand.hbm [shape: f32[2], index: 0, kind: input, shape index: {}]
  %s1 = inlined_call_operand.hbm [shape: f32[2,8,128], index: 1, kind: input, shape index: {}]
  %s2 = inlined_call_operand.hbm [shape: f32[2,8,128], index: 2, kind: input, shape index: {}]
  %s3 = inlined_call_operand.hbm [shape: f32[1,1], index: 3, kind: output, shape index: {}]
  %s4 = sld [smem:[#allocation0]]
  $region73: #{tpu_custom_call.1} parent=0
    _
  %s6 = ssub.s32 1, %s4
  %s7 = scalar_select 0, %s6, %s4
  $region1: #{tpu_custom_call.1} parent=0
    #allocation3 [shape = 'u8[512]{0}', space=smem, size = 0x200, scoped, tag = 'input window, operand 0, single buffered']
    #allocation4 [shape = 's32[2]{0}', space=sflag, size = 0x8, scoped, tag = 'scoped memory for tpu_custom_call.1']
    #allocation5 [shape = 's32[2]{0}', space=sflag, size = 0x8, scoped, tag = 'scoped memory for tpu_custom_call.1']
    #allocation6 [shape = 's32[2]{0}', space=sflag, size = 0x8, scoped, tag = 'scoped memory for tpu_custom_call.1']
    #allocation7 [shape = 'u8[8192]{0}', space=vmem, size = 0x2000, scoped, tag = 'input window, operand 1']
    #allocation8 [shape = 'u8[8192]{0}', space=vmem, size = 0x2000, scoped, tag = 'input window, operand 2']
    #allocation9 [shape = 's32[2]{0}', space=sflag, size = 0x8, scoped, tag = 'scoped memory for tpu_custom_call.1']
    #allocation10 [shape = 'u8[512]{0}', space=smem, size = 0x200, scoped, tag = 'output window, operand 0, single buffered']
    %8 = vsyncpa [#allocation5], 0
    %9 = vsyncpa [#allocation4], 0
    %s10 = scalar_lea.sflag [#allocation4], 1
    %11 = vsyncpa %s10, 0
    %12 = vsyncpa [#allocation9], 0
    %s13 = scalar_lea.sflag [#allocation9], 1
    %14 = vsyncpa %s13, 0
    %15 = vsyncpa [#allocation6], 0
    loop: start=0, step=1, limit=4
    $region2: #{tpu_custom_call.1} parent=1 // loop_pre_header
      _
    $region3: #{tpu_custom_call.1} parent=1 // loop_header
      %s17 = sphi 0, %s21
      %p18 = scmp.ge.s32.totalorder %s17, 4
      %s24 = sphi 0, %s43
      %s25 = sphi 0, %s39
      %s26 = sphi 0, %s35
      %s27 = sphi 0, %s24
      %s28 = sphi 0, %s25
      %s29 = sphi 0, %s26
      %s30 = sphi 0, %s27
      %s31 = sphi 0, %s28
      %s32 = sphi 0, %s29
      %s44 = sphi 0, %s44
      %s46 = sphi 0, %s44
      %s47 = sphi 0, %s46
      %s61 = sphi 0, %s47
      %s75 = sphi 0, %s77
      %s78 = sphi 0, %s75
      %s79 = sphi 0, %s78
      %s95 = sphi 0, %s79
      %s109 = sphi 0, %s111
      %s112 = sphi 0, %s109
      %s113 = sphi 0, %s112
      %s129 = sphi 0, %s113
      %s135 = sphi 0, %s137
      %s138 = sphi 0, %s135
      %s139 = sphi 0, %s138
      %s155 = sphi 0, %s139
    $region4: #{tpu_custom_call.1} parent=1 // loop_header_branch
      %20 = sbr.rel (%p18) target = $region8
    $region5: #{tpu_custom_call.1} parent=1 // loop_body
      %s22 = ssub.s32 %s17, 1
      %s23 = ssub.s32 %s17, 2
      %s33 = sadd.s32 1, %s26
      %p34 = scmp.ge.s32.totalorder %s33, 1
      %s35 = scalar_select %p34, 0, %s33
      %s36 = sadd.s32 1, %s25
      %s37 = scalar_select %p34, %s36, %s25
      %p38 = scmp.ge.s32.totalorder %s37, 2
      %s39 = scalar_select %p38, 0, %s37
      %s40 = sadd.s32 1, %s24
      %s41 = scalar_select %p38, %s40, %s24
      %p42 = scmp.ge.s32.totalorder %s41, 1
      %s43 = scalar_select %p42, 0, %s41
      %s45 = sadd.s32 %s44, 1
      %p48 = scmp.eq.s32.totalorder %s17, 1
      %p49 = scmp.ne.s32.totalorder %s44, %s46
      %p50 = scmp.eq.s32.totalorder %s17, 0
      %p51 = por %p49, %p50
      %p52 = scmp.ne.s32.totalorder %s44, %s46
      %p53 = scmp.eq.s32.totalorder %s22, 1
      %p54 = por %p52, %p53
      %p55 = scmp.ne.s32.totalorder %s46, %s47
      %p56 = scmp.eq.s32.totalorder %s22, 0
      %p57 = por %p55, %p56
      %p58 = scmp.ne.s32.totalorder %s46, %s47
      %p59 = scmp.eq.s32.totalorder %s23, 1
      %p60 = por %p58, %p59
      %p62 = scmp.ne.s32.totalorder %s47, %s61
      %p63 = scmp.eq.s32.totalorder %s23, 0
      %p64 = por %p62, %p63
      %s65 = sadd.s32 %s24, %s26
      %p66 = scmp.lt.s32.totalorder %s65, 0
      %s67 = scalar_select %p66, %s65, 0
      %s68 = sadd.s32 %s43, %s35
      %p69 = scmp.lt.s32.totalorder %s68, 0
      %s70 = scalar_select %p69, %s68, 0
      %s71 = ssub.s32 %s25, %s39
      %s72 = ssub.s32 %s67, %s70
      %s73 = sor.u32 %s71, %s72
      %p74 = scmp.eq.s32.totalorder %s73, 0
      %s76 = sadd.s32 %s75, 1
      %s77 = scalar_select %p74, %s75, %s76
      %p80 = pneg %p74
      %p81 = scmp.eq.s32.totalorder %s17, 1
      %p82 = por %p80, %p81
      %p83 = scmp.ne.s32.totalorder %s75, %s78
      %p84 = scmp.eq.s32.totalorder %s17, 0
      %p85 = por %p83, %p84
      %p86 = scmp.ne.s32.totalorder %s75, %s78
      %p87 = scmp.eq.s32.totalorder %s22, 1
      %p88 = por %p86, %p87
      %p89 = scmp.ne.s32.totalorder %s78, %s79
      %p90 = scmp.eq.s32.totalorder %s22, 0
      %p91 = por %p89, %p90
      %p92 = scmp.ne.s32.totalorder %s78, %s79
      %p93 = scmp.eq.s32.totalorder %s23, 1
      %p94 = por %p92, %p93
      %p96 = scmp.ne.s32.totalorder %s79, %s95
      %p97 = scmp.eq.s32.totalorder %s23, 0
      %p98 = por %p96, %p97
      %s99 = sadd.s32 %s24, %s26
      %p100 = scmp.lt.s32.totalorder %s99, 0
      %s101 = scalar_select %p100, %s99, 0
      %s102 = sadd.s32 %s43, %s35
      %p103 = scmp.lt.s32.totalorder %s102, 0
      %s104 = scalar_select %p103, %s102, 0
      %s105 = ssub.s32 %s25, %s39
      %s106 = ssub.s32 %s101, %s104
      %s107 = sor.u32 %s105, %s106
      %p108 = scmp.eq.s32.totalorder %s107, 0
      %s110 = sadd.s32 %s109, 1
      %s111 = scalar_select %p108, %s109, %s110
      %p114 = pneg %p108
      %p115 = scmp.eq.s32.totalorder %s17, 1
      %p116 = por %p114, %p115
      %p117 = scmp.ne.s32.totalorder %s109, %s112
      %p118 = scmp.eq.s32.totalorder %s17, 0
      %p119 = por %p117, %p118
      %p120 = scmp.ne.s32.totalorder %s109, %s112
      %p121 = scmp.eq.s32.totalorder %s22, 1
      %p122 = por %p120, %p121
      %p123 = scmp.ne.s32.totalorder %s112, %s113
      %p124 = scmp.eq.s32.totalorder %s22, 0
      %p125 = por %p123, %p124
      %p126 = scmp.ne.s32.totalorder %s112, %s113
      %p127 = scmp.eq.s32.totalorder %s23, 1
      %p128 = por %p126, %p127
      %p130 = scmp.ne.s32.totalorder %s113, %s129
      %p131 = scmp.eq.s32.totalorder %s23, 0
      %p132 = por %p130, %p131
      %s133 = ssub.s32 %s24, %s43
      %p134 = scmp.eq.s32.totalorder %s133, 0
      %s136 = sadd.s32 %s135, 1
      %s137 = scalar_select %p134, %s135, %s136
      %p140 = pneg %p134
      %p141 = scmp.eq.s32.totalorder %s17, 1
      %p142 = por %p140, %p141
      %p143 = scmp.ne.s32.totalorder %s135, %s138
      %p144 = scmp.eq.s32.totalorder %s17, 0
      %p145 = por %p143, %p144
      %p146 = scmp.ne.s32.totalorder %s135, %s138
      %p147 = scmp.eq.s32.totalorder %s22, 1
      %p148 = por %p146, %p147
      %p149 = scmp.ne.s32.totalorder %s138, %s139
      %p150 = scmp.eq.s32.totalorder %s22, 0
      %p151 = por %p149, %p150
      %p152 = scmp.ne.s32.totalorder %s138, %s139
      %p153 = scmp.eq.s32.totalorder %s23, 1
      %p154 = por %p152, %p153
      %p156 = scmp.ne.s32.totalorder %s139, %s155
      %p157 = scmp.eq.s32.totalorder %s23, 0
      %p158 = por %p156, %p157
      %p159 = scmp.le.s32.totalorder 1, %s17
      %p160 = scmp.lt.s32.totalorder %s17, 3
      %p161 = pnand %p159, %p160
      %p162 = pneg %p161
      // Predicated region
      $region9: #{tpu_custom_call.1} parent=5 // pred_check
        _
      $region10: #{tpu_custom_call.1} parent=5 // pred_check_branch
        %164 = sbr.rel (%p161) target = $region12
      $region11: #{tpu_custom_call.1} parent=5 // pred_region
        %s165 = ssub.s32 %s17, 1
        // Predicated region
        $region13: #{tpu_custom_call.1} parent=11 // pred_check
          %p166 = pneg %p57
        $region14: #{tpu_custom_call.1} parent=11 // pred_check_branch
          %168 = sbr.rel (%p166) target = $region16
        $region15: #{tpu_custom_call.1} parent=11 // pred_region
          %170 = vsyncadd [#allocation5], 0
          %s172 = sshll.u32 %s0, 4
          %s173 = int_to_ptr.hbm [resolvable:$true] %s172
          %175 = dma.hbm_to_smem %s173, 16, [#allocation3], [#allocation5]
        $region16: #{tpu_custom_call.1} parent=11 // pred_fallthru
          _
      $region12: #{tpu_custom_call.1} parent=5 // pred_fallthru
        _
      %p176 = scmp.lt.s32.totalorder %s17, 2
      // Predicated region
      $region17: #{tpu_custom_call.1} parent=5 // pred_check
        %p177 = pneg %p176
      $region18: #{tpu_custom_call.1} parent=5 // pred_check_branch
        %179 = sbr.rel (%p177) target = $region20
      $region19: #{tpu_custom_call.1} parent=5 // pred_region
        // Predicated region
        $region21: #{tpu_custom_call.1} parent=19 // pred_check
          %p180 = pneg %p85
        $region22: #{tpu_custom_call.1} parent=19 // pred_check_branch
          %182 = sbr.rel (%p180) target = $region24
        $region23: #{tpu_custom_call.1} parent=19 // pred_region
          %s183 = sand.u32 %s75, 1
          %s184 = scalar_lea.sflag [#allocation4], %s183
          %s185 = sand.u32 %s75, 1
          %s186 = smul.addr %s185, 8
          %s187 = scalar_lea.vmem [#allocation7], %s186
          %s188 = sadd.s32 %s24, %s26
          %p189 = scmp.lt.s32.totalorder %s188, 0
          %s190 = scalar_select %p189, %s188, 0
          %192 = vsyncadd %s184, 0
          %s193 = sadd.s32 %s190, %s25
          %s194 = smul.addr %s193, 8
          %s195 = scalar_lea.hbm %s1, %s194
          %s197 = sshll.u32 %s195, 4
          %s198 = int_to_ptr.hbm [resolvable:$true] %s197
          %s199 = sshll.u32 %s187, 4
          %s200 = int_to_ptr.vmem [resolvable:$true] %s199
          %202 = dma.hbm_to_vmem [thread:$0]  %s198, 128, %s200, %s184
        $region24: #{tpu_custom_call.1} parent=19 // pred_fallthru
          _
        // Predicated region
        $region25: #{tpu_custom_call.1} parent=19 // pred_check
          %p203 = pneg %p119
        $region26: #{tpu_custom_call.1} parent=19 // pred_check_branch
          %205 = sbr.rel (%p203) target = $region28
        $region27: #{tpu_custom_call.1} parent=19 // pred_region
          %s206 = sand.u32 %s109, 1
          %s207 = scalar_lea.sflag [#allocation9], %s206
          %s208 = sand.u32 %s109, 1
          %s209 = smul.addr %s208, 8
          %s210 = scalar_lea.vmem [#allocation8], %s209
          %s211 = sadd.s32 %s24, %s26
          %p212 = scmp.lt.s32.totalorder %s211, 0
          %s213 = scalar_select %p212, %s211, 0
          %215 = vsyncadd %s207, 0
          %s216 = sadd.s32 %s213, %s25
          %s217 = smul.addr %s216, 8
          %s218 = scalar_lea.hbm %s2, %s217
          %s220 = sshll.u32 %s218, 4
          %s221 = int_to_ptr.hbm [resolvable:$true] %s220
          %s222 = sshll.u32 %s210, 4
          %s223 = int_to_ptr.vmem [resolvable:$true] %s222
          %225 = dma.hbm_to_vmem [thread:$0]  %s221, 128, %s223, %s207
        $region28: #{tpu_custom_call.1} parent=19 // pred_fallthru
          _
      $region20: #{tpu_custom_call.1} parent=5 // pred_fallthru
        _
      %p226 = scmp.le.s32.totalorder 1, %s17
      %p227 = scmp.lt.s32.totalorder %s17, 3
      %p228 = pnand %p226, %p227
      %p229 = pneg %p228
      // Predicated region
      $region29: #{tpu_custom_call.1} parent=5 // pred_check
        _
      $region30: #{tpu_custom_call.1} parent=5 // pred_check_branch
        %231 = sbr.rel (%p228) target = $region32
      $region31: #{tpu_custom_call.1} parent=5 // pred_region
        %s232 = ssub.s32 %s17, 1
        // Predicated region
        $region33: #{tpu_custom_call.1} parent=31 // pred_check
          %p233 = pneg %p57
        $region34: #{tpu_custom_call.1} parent=31 // pred_check_branch
          %235 = sbr.rel (%p233) target = $region36
        $region35: #{tpu_custom_call.1} parent=31 // pred_region
          %237 = dma.done [#allocation5], 16
        $region36: #{tpu_custom_call.1} parent=31 // pred_fallthru
          _
        %s238 = sand.u32 %s78, 1
        %s239 = scalar_lea.sflag [#allocation4], %s238
        %s240 = sand.u32 %s78, 1
        %s241 = smul.addr %s240, 8
        %s242 = scalar_lea.vmem [#allocation7], %s241
        // Predicated region
        $region37: #{tpu_custom_call.1} parent=31 // pred_check
          %p243 = pneg %p91
        $region38: #{tpu_custom_call.1} parent=31 // pred_check_branch
          %245 = sbr.rel (%p243) target = $region40
        $region39: #{tpu_custom_call.1} parent=31 // pred_region
          %247 = dma.done %s239, 128
        $region40: #{tpu_custom_call.1} parent=31 // pred_fallthru
          _
        %s248 = sand.u32 %s112, 1
        %s249 = scalar_lea.sflag [#allocation9], %s248
        %s250 = sand.u32 %s112, 1
        %s251 = smul.addr %s250, 8
        %s252 = scalar_lea.vmem [#allocation8], %s251
        // Predicated region
        $region41: #{tpu_custom_call.1} parent=31 // pred_check
          %p253 = pneg %p125
        $region42: #{tpu_custom_call.1} parent=31 // pred_check_branch
          %255 = sbr.rel (%p253) target = $region44
        $region43: #{tpu_custom_call.1} parent=31 // pred_region
          %257 = dma.done %s249, 128
        $region44: #{tpu_custom_call.1} parent=31 // pred_fallthru
          _
        %258 = sfence
        %p259 = pneg %p57
        %p260 = pneg %p54
        %s261 = sand.u32 %s78, 1
        %s262 = scalar_lea.sflag [#allocation4], %s261
        %s263 = sand.u32 %s78, 1
        %s264 = smul.addr %s263, 8
        %s265 = scalar_lea.vmem [#allocation7], %s264
        %p266 = pneg %p91
        %p267 = pneg %p88
        %s268 = sand.u32 %s112, 1
        %s269 = scalar_lea.sflag [#allocation9], %s268
        %s270 = sand.u32 %s112, 1
        %s271 = smul.addr %s270, 8
        %s272 = scalar_lea.vmem [#allocation8], %s271
        %p273 = pneg %p125
        %p274 = pneg %p122
        %p275 = pneg %p151
        %p276 = pneg %p148
        %s277 = sadd.s32 %s27, %s29
        %p278 = scmp.lt.s32.totalorder %s277, 0
        %s279 = scalar_select %p278, %s277, 0
        %s280 = sadd.s32 %s27, %s29
        %p281 = scmp.lt.s32.totalorder %s280, 0
        %s282 = scalar_select %p281, %s280, 0
        %p283 = scmp.eq.s32.totalorder %s28, 0
        %p284 = scmp.eq.s32.totalorder %s29, 0
        %p285 = pnand %p283, %p284
        %p286 = pneg %p285
        // Predicated region
        $region45: #{tpu_custom_call.1} parent=31 // pred_check
          _
        $region46: #{tpu_custom_call.1} parent=31 // pred_check_branch
          %288 = sbr.rel (%p285) target = $region48
        $region47: #{tpu_custom_call.1} parent=31 // pred_region
          %289 = vst [vmem:[#allocation2] sm:$0xff] 0.0
        $region48: #{tpu_custom_call.1} parent=31 // pred_fallthru
          _
        %s290 = sadd.s32 %s27, %s29
        %s291 = smul.u32 %s290, 8
        %s292 = ssub.s32 8, %s291
        %s293 = sld [smem:[#allocation3 + %s28]]
        %v294 = vld [vmem:[%s242] sm:$0xff]
        %v295 = vld [vmem:[%s252] sm:$0xff]
        %v296 = vstv %s293
        %v297 = vmul.f32 %v296, %v294
        %v298 = vadd.f32 %v297, %v295
        %v299 = vmul.f32 %v298, %v298
        %p300 = scmp.ge.s32.totalorder %s292, 8
        // Predicated region
        $region49: #{tpu_custom_call.1} parent=31 // pred_check
          %p301 = pneg %p300
        $region50: #{tpu_custom_call.1} parent=31 // pred_check_branch
          %303 = sbr.rel (%p301) target = $region52
        $region51: #{tpu_custom_call.1} parent=31 // pred_region
          %v304 = vld [vmem:[#allocation2] sm:$0xff]
          %v305 = vadd.f32 %v299, 0.0
          %v306 = vadd.f32 %v304, %v305
          %307 = vst [vmem:[#allocation2] sm:$0xff] %v306
        $region52: #{tpu_custom_call.1} parent=31 // pred_fallthru
          _
        %p308 = scmp.lt.s32.totalorder %s292, 8
        // Predicated region
        $region53: #{tpu_custom_call.1} parent=31 // pred_check
          %p309 = pneg %p308
        $region54: #{tpu_custom_call.1} parent=31 // pred_check_branch
          %311 = sbr.rel (%p309) target = $region56
        $region55: #{tpu_custom_call.1} parent=31 // pred_region
          %v312 = vlaneseq
          %v313 = vshrl.u32 %v312, 7
          %v314 = vstv %s292
          %vm315 = vcmp.lt.s32.totalorder %v313, %v314
          %v316 = vsel %vm315, %v299, 0.0
          %v317 = vld [vmem:[#allocation2] sm:$0xff]
          %v318 = vadd.f32 %v316, 0.0
          %v319 = vadd.f32 %v317, %v318
          %320 = vst [vmem:[#allocation2] sm:$0xff] %v319
        $region56: #{tpu_custom_call.1} parent=31 // pred_fallthru
          _
        %p321 = scmp.eq.s32.totalorder %s28, 1
        %p322 = pnand %p321, %p284
        %p323 = pneg %p322
        // Predicated region
        $region57: #{tpu_custom_call.1} parent=31 // pred_check
          _
        $region58: #{tpu_custom_call.1} parent=31 // pred_check_branch
          %325 = sbr.rel (%p322) target = $region60
        $region59: #{tpu_custom_call.1} parent=31 // pred_region
          %v326 = vld [vmem:[#allocation2] sm:$0xff]
          %327 = vadd.xlane.f32.xlu0 %v326
          %v328 = vpop.xlane.xlu0 %327
          %v329 = vrot.slane %v328, 4
          %v330 = vadd.f32 %v328, %v329
          %v331 = vrot.slane %v330, 2
          %v332 = vadd.f32 %v330, %v331
          %v333 = vrot.slane %v332, 1
          %v334 = vadd.f32 %v332, %v333
          %s335 = vtos %v334
          %s336 = smul.f32 %s335, 0.25
          %s337 = scalar_lea.smem [#allocation10], 0
          %338 = sst [smem:[%s337]] %s336
        $region60: #{tpu_custom_call.1} parent=31 // pred_fallthru
          _
        // Predicated region
        $region61: #{tpu_custom_call.1} parent=31 // pred_check
          %p339 = pneg %p148
        $region62: #{tpu_custom_call.1} parent=31 // pred_check_branch
          %341 = sbr.rel (%p339) target = $region64
        $region63: #{tpu_custom_call.1} parent=31 // pred_region
          %343 = vsyncadd [#allocation6], 0
          %s344 = scalar_lea.hbm %s3, %s27
          %s346 = sshll.u32 %s344, 4
          %s347 = int_to_ptr.hbm [resolvable:$true] %s346
          %349 = dma.smem_to_hbm [#allocation10], 16, %s347, [#allocation6]
        $region64: #{tpu_custom_call.1} parent=31 // pred_fallthru
          _
        // Predicated region
        $region65: #{tpu_custom_call.1} parent=31 // pred_check
          %p350 = pneg %p148
        $region66: #{tpu_custom_call.1} parent=31 // pred_check_branch
          %352 = sbr.rel (%p350) target = $region68
        $region67: #{tpu_custom_call.1} parent=31 // pred_region
          %354 = dma.done [#allocation6], 16
        $region68: #{tpu_custom_call.1} parent=31 // pred_fallthru
          _
        %355 = sfence
      $region32: #{tpu_custom_call.1} parent=5 // pred_fallthru
        _
      %p356 = scmp.le.s32.totalorder 2, %s17
      // Predicated region
      $region69: #{tpu_custom_call.1} parent=5 // pred_check
        %p357 = pneg %p356
      $region70: #{tpu_custom_call.1} parent=5 // pred_check_branch
        %359 = sbr.rel (%p357) target = $region72
      $region71: #{tpu_custom_call.1} parent=5 // pred_region
        %s360 = ssub.s32 %s17, 2
      $region72: #{tpu_custom_call.1} parent=5 // pred_fallthru
        _
    $region6: #{tpu_custom_call.1} parent=1 // loop_footer
      %s21 = sadd.s32 1, %s17
    $region7: #{tpu_custom_call.1} parent=1 // loop_footer_branch
      %16 = sbr.rel target = $region3
    $region8: #{tpu_custom_call.1} parent=1 // loop_exit
      _
    %361 = vsyncpa [#allocation4], 1
    %s362 = scalar_lea.sflag [#allocation4], 1
    %363 = vsyncpa %s362, 1
    %364 = vsyncpa [#allocation9], 1
    %s365 = scalar_lea.sflag [#allocation9], 1
    %366 = vsyncpa %s365, 1
    %367 = vsyncpa [#allocation5], 1
    %s368 = scalar_lea.sflag [#allocation5], 1
    %369 = vsyncpa %s368, 1
    %370 = vsyncpa [#allocation6], 1
    %s371 = scalar_lea.sflag [#allocation6], 1
    %372 = vsyncpa %s371, 1

</llo_original>
